<compile_context>
chip_gen: v5e
topology: v5e:2x2
jax: 0.10.0
libtpu: 0.0.40
codegen_flags: <defaults>
</compile_context>

<pallas_src>
import functools

import jax
import jax.numpy as jnp
from jax.experimental import pallas as pl
from jax.experimental.pallas import tpu as pltpu


def _round_up(x, m):
    return (x + m - 1) // m * m


def _mlp_decoder_kernel(x_ref, w_ref, b_ref, o_ref, *, n_layers, d_pad):
    """One batch tile of the fused MLP decoder.

    x_ref : [TB, d_pad] f32              batch tile, features zero-padded to d_pad
    w_ref : [n_layers*d_pad, d_pad]      packed weights (last layer pre-scaled by 3)
    b_ref : [n_layers, d_pad] f32        packed biases  (last bias pre-scaled by 3)
    o_ref : [TB, d_pad] f32              lane-dense output slab
    """
    mm_dtype = w_ref.dtype
    h = x_ref[...]                                     # f32 [TB, d_pad]
    for i in range(n_layers):                          # small, static trip count
        w = w_ref[pl.ds(i * d_pad, d_pad), :]          # static slice of resident slab
        b = b_ref[pl.ds(i, 1), :]                      # [1, d_pad] f32, broadcast add
        y = jnp.dot(h.astype(mm_dtype), w,             # MXU, f32 accumulation
                    preferred_element_type=jnp.float32)
        y = y + b                                      # elementwise kept in f32 (v5e-safe)
        h = jnp.maximum(y, 0.0) if i < n_layers - 1 else y
    o_ref[...] = h.astype(o_ref.dtype)                 # 3x already folded into layer n-1


def _pack_params(params, d_pad, matmul_dtype):
    """Pack all (W[in,out], b[out]) pairs into one lane-padded weight slab and
    one bias slab; fold the module's final 3x output scale into the last layer."""
    n = len(params)
    w_slab = jnp.zeros((n * d_pad, d_pad), matmul_dtype)
    b_slab = jnp.zeros((n, d_pad), jnp.float32)
    for i, (w, b) in enumerate(params):
        scale = 3.0 if i == n - 1 else 1.0
        fi, fo = w.shape
        w_slab = w_slab.at[i * d_pad:i * d_pad + fi, :fo].set(
            (scale * w).astype(matmul_dtype))
        b_slab = b_slab.at[i, :fo].set(
            scale * jnp.reshape(b, (-1,)).astype(jnp.float32))
    return w_slab, b_slab


def fixed_width_mlp_decoder(x, params, *, matmul_dtype=jnp.float32, batch_tile=128):
    """params: list of (W[in,out], b[out]) for the Linear layers (PyTorch order).

    Computes 3 * MLP(x) where MLP = Linear->ReLU->...->Linear, matching
    fixed_width_mlp_Decoder.forward.
    """
    batch, gdim = x.shape
    n = len(params)
    data_dim = params[-1][0].shape[1]

    # Shared lane-dense feature width for every layer.
    dims = [gdim] + [w.shape[1] for w, _ in params]
    d_pad = _round_up(max(dims), 128)

    w_slab, b_slab = _pack_params(params, d_pad, matmul_dtype)

    # Batch tiling: multiples of 8 sublanes, up to `batch_tile` rows per step.
    tb = min(batch_tile, _round_up(batch, 8))
    batch_p = _round_up(batch, tb)
    x_p = jnp.zeros((batch_p, d_pad), jnp.float32).at[:batch, :gdim].set(x)

    grid = (batch_p // tb,)

    # VMEM budget: double-buffered x/out tiles + resident packed params +
    # a few f32 intermediates.  Raise the scoped limit only when we exceed the
    # 32 MiB default.
    tile_bytes = tb * d_pad * 4
    slab_bytes = (w_slab.size * w_slab.dtype.itemsize
                  + b_slab.size * b_slab.dtype.itemsize)
    vmem_bytes = 8 * tile_bytes + 2 * slab_bytes
    cp_kwargs = dict(dimension_semantics=("parallel",))
    if vmem_bytes > (32 << 20):
        cp_kwargs["vmem_limit_bytes"] = min(vmem_bytes + (8 << 20), 128 << 20)

    kernel = functools.partial(_mlp_decoder_kernel, n_layers=n, d_pad=d_pad)
    out_p = pl.pallas_call(
        kernel,
        out_shape=jax.ShapeDtypeStruct((batch_p, d_pad), jnp.float32),
        grid=grid,
        in_specs=[
            pl.BlockSpec((tb, d_pad), lambda i: (i, 0)),    # x: pipelined over batch
            pl.BlockSpec(w_slab.shape, lambda i: (0, 0)),   # weights: VMEM-resident
            pl.BlockSpec(b_slab.shape, lambda i: (0, 0)),   # biases:  VMEM-resident
        ],
        out_specs=pl.BlockSpec((tb, d_pad), lambda i: (i, 0)),
        compiler_params=pltpu.CompilerParams(**cp_kwargs),
    )(x_p, w_slab, b_slab)

    return out_p[:batch, :data_dim]


def init_params(key, gaussian_dim, latent_dim, hidden_dim, data_dim, n_layers=2):
    """Kaiming-normal weights (fan_in, gain=sqrt(2)) like the PyTorch module;
    biases use nn.Linear's default uniform(-1/sqrt(fan_in), 1/sqrt(fan_in))."""
    dims = [(gaussian_dim, latent_dim), (latent_dim, hidden_dim)]
    for _ in range(n_layers - 1):
        dims.append((hidden_dim, hidden_dim))
    dims.append((hidden_dim, data_dim))

    params = []
    for (fan_in, fan_out) in dims:
        key, kw, kb = jax.random.split(key, 3)
        std = (2.0 / fan_in) ** 0.5
        w = std * jax.random.normal(kw, (fan_in, fan_out), jnp.float32)
        bound = 1.0 / (fan_in ** 0.5)
        b = jax.random.uniform(kb, (fan_out,), jnp.float32, -bound, bound)
        params.append((w, b))
    return params


def reference_forward(x, params):
    h = x
    n = len(params)
    for i, (w, b) in enumerate(params):
        h = h @ w + b
        if i < n - 1:
            h = jnp.maximum(h, 0.0)
    return 3.0 * h


if __name__ == "__main__":
    key = jax.random.PRNGKey(0)
    batch = 8
    gaussian_dim, latent_dim, hidden_dim, data_dim = 16, 32, 64, 16

    key, kx = jax.random.split(key)
    x = jax.random.normal(kx, (batch, gaussian_dim), jnp.float32)
    params = init_params(key, gaussian_dim, latent_dim, hidden_dim, data_dim,
                         n_layers=2)

    ref = reference_forward(x, params)

    # f32 MXU-operand path: matches the f32 reference tightly.
    out = jax.block_until_ready(fixed_width_mlp_decoder(x, params))
    assert out.shape == (batch, data_dim)
    assert jnp.allclose(out, ref, atol=1e-4, rtol=1e-4), "f32 mismatch vs reference"

    # bf16 MXU-operand path (v6e/v7x): f32 accumulation, looser tolerance.
    out_bf16 = jax.block_until_ready(
        fixed_width_mlp_decoder(x, params, matmul_dtype=jnp.bfloat16))
    assert out_bf16.shape == (batch, data_dim)
    assert jnp.allclose(out_bf16, ref, atol=2e-1, rtol=2e-1), "bf16 mismatch vs reference"

    print("KERNEL_OK")
</pallas_src>

<mosaic_0001>
module attributes {stable_mosaic.version = 11 : i64} {
  func.func @_mlp_decoder_kernel(%arg0: i32, %arg1: memref<8x128xf32, #tpu.memory_space<vmem>>, %arg2: memref<512x128xf32, #tpu.memory_space<vmem>>, %arg3: memref<4x128xf32, #tpu.memory_space<vmem>>, %arg4: memref<8x128xf32, #tpu.memory_space<vmem>>) attributes {dimension_semantics = [#tpu.dimension_semantics<parallel>], iteration_bounds = array<i64: 1>, scalar_prefetch = 0 : i64, scratch_operands = 0 : i64, tpu.core_type = #tpu.core_type<tc>, window_params = [{transform_indices = @transform_0, window_bounds = array<i64: 8, 128>}, {pipeline_mode = #tpu.pipeline_mode<synchronous>, transform_indices = @transform_1, window_bounds = array<i64: 512, 128>}, {pipeline_mode = #tpu.pipeline_mode<synchronous>, transform_indices = @transform_2, window_bounds = array<i64: 4, 128>}, {transform_indices = @transform_3, window_bounds = array<i64: 8, 128>}]} {
    %c0 = arith.constant 0 : index
    %c0_0 = arith.constant 0 : index
    %0 = vector.load %arg1[%c0, %c0_0] : memref<8x128xf32, #tpu.memory_space<vmem>>, vector<8x128xf32>
    %c0_1 = arith.constant 0 : index
    %c0_2 = arith.constant 0 : index
    %1 = vector.load %arg2[%c0_1, %c0_2] : memref<512x128xf32, #tpu.memory_space<vmem>>, vector<128x128xf32>
    %c0_3 = arith.constant 0 : index
    %c0_4 = arith.constant 0 : index
    %2 = vector.load %arg3[%c0_3, %c0_4] : memref<4x128xf32, #tpu.memory_space<vmem>>, vector<1x128xf32>
    %cst = arith.constant dense<0.000000e+00> : vector<8x128xf32>
    %3 = tpu.matmul %0, %1, %cst {dimension_numbers = #tpu.dot_dimension_numbers<[1], [0], [0], [1], [0, 0, 1, 1], [], []>} : vector<8x128xf32>, vector<128x128xf32>, vector<8x128xf32> -> vector<8x128xf32>
    %4 = vector.broadcast %2 : vector<1x128xf32> to vector<8x128xf32>
    %5 = arith.addf %3, %4 : vector<8x128xf32>
    %cst_5 = arith.constant 0.000000e+00 : f32
    %6 = vector.broadcast %cst_5 : f32 to vector<8x128xf32>
    %7 = arith.maximumf %5, %6 : vector<8x128xf32>
    %c128 = arith.constant 128 : index
    %c0_6 = arith.constant 0 : index
    %8 = vector.load %arg2[%c128, %c0_6] : memref<512x128xf32, #tpu.memory_space<vmem>>, vector<128x128xf32>
    %c1 = arith.constant 1 : index
    %c0_7 = arith.constant 0 : index
    %9 = vector.load %arg3[%c1, %c0_7] : memref<4x128xf32, #tpu.memory_space<vmem>>, vector<1x128xf32>
    %cst_8 = arith.constant dense<0.000000e+00> : vector<8x128xf32>
    %10 = tpu.matmul %7, %8, %cst_8 {dimension_numbers = #tpu.dot_dimension_numbers<[1], [0], [0], [1], [0, 0, 1, 1], [], []>} : vector<8x128xf32>, vector<128x128xf32>, vector<8x128xf32> -> vector<8x128xf32>
    %11 = vector.broadcast %9 : vector<1x128xf32> to vector<8x128xf32>
    %12 = arith.addf %10, %11 : vector<8x128xf32>
    %cst_9 = arith.constant 0.000000e+00 : f32
    %13 = vector.broadcast %cst_9 : f32 to vector<8x128xf32>
    %14 = arith.maximumf %12, %13 : vector<8x128xf32>
    %c256 = arith.constant 256 : index
    %c0_10 = arith.constant 0 : index
    %15 = vector.load %arg2[%c256, %c0_10] : memref<512x128xf32, #tpu.memory_space<vmem>>, vector<128x128xf32>
    %c2 = arith.constant 2 : index
    %c0_11 = arith.constant 0 : index
    %16 = vector.load %arg3[%c2, %c0_11] : memref<4x128xf32, #tpu.memory_space<vmem>>, vector<1x128xf32>
    %cst_12 = arith.constant dense<0.000000e+00> : vector<8x128xf32>
    %17 = tpu.matmul %14, %15, %cst_12 {dimension_numbers = #tpu.dot_dimension_numbers<[1], [0], [0], [1], [0, 0, 1, 1], [], []>} : vector<8x128xf32>, vector<128x128xf32>, vector<8x128xf32> -> vector<8x128xf32>
    %18 = vector.broadcast %16 : vector<1x128xf32> to vector<8x128xf32>
    %19 = arith.addf %17, %18 : vector<8x128xf32>
    %cst_13 = arith.constant 0.000000e+00 : f32
    %20 = vector.broadcast %cst_13 : f32 to vector<8x128xf32>
    %21 = arith.maximumf %19, %20 : vector<8x128xf32>
    %c384 = arith.constant 384 : index
    %c0_14 = arith.constant 0 : index
    %22 = vector.load %arg2[%c384, %c0_14] : memref<512x128xf32, #tpu.memory_space<vmem>>, vector<128x128xf32>
    %c3 = arith.constant 3 : index
    %c0_15 = arith.constant 0 : index
    %23 = vector.load %arg3[%c3, %c0_15] : memref<4x128xf32, #tpu.memory_space<vmem>>, vector<1x128xf32>
    %cst_16 = arith.constant dense<0.000000e+00> : vector<8x128xf32>
    %24 = tpu.matmul %21, %22, %cst_16 {dimension_numbers = #tpu.dot_dimension_numbers<[1], [0], [0], [1], [0, 0, 1, 1], [], []>} : vector<8x128xf32>, vector<128x128xf32>, vector<8x128xf32> -> vector<8x128xf32>
    %25 = vector.broadcast %23 : vector<1x128xf32> to vector<8x128xf32>
    %26 = arith.addf %24, %25 : vector<8x128xf32>
    %c0_17 = arith.constant 0 : index
    %c0_18 = arith.constant 0 : index
    %27 = vector.load %arg4[%c0_17, %c0_18] : memref<8x128xf32, #tpu.memory_space<vmem>>, vector<8x128xf32>
    tpu.vector_store %arg4[%c0_17, %c0_18], %26 {strides = array<i32>} : memref<8x128xf32, #tpu.memory_space<vmem>>, vector<8x128xf32>,
    return
  }
  func.func @transform_0(%arg0: i32) -> (i32, i32) {
    %c0_i32 = arith.constant 0 : i32
    %c0_i32_0 = arith.constant 0 : i32
    return %arg0, %c0_i32 : i32, i32
  }
  func.func @transform_1(%arg0: i32) -> (i32, i32) {
    %c0_i32 = arith.constant 0 : i32
    %c0_i32_0 = arith.constant 0 : i32
    %c0_i32_1 = arith.constant 0 : i32
    return %c0_i32, %c0_i32_0 : i32, i32
  }
  func.func @transform_2(%arg0: i32) -> (i32, i32) {
    %c0_i32 = arith.constant 0 : i32
    %c0_i32_0 = arith.constant 0 : i32
    %c0_i32_1 = arith.constant 0 : i32
    return %c0_i32, %c0_i32_0 : i32, i32
  }
  func.func @transform_3(%arg0: i32) -> (i32, i32) {
    %c0_i32 = arith.constant 0 : i32
    %c0_i32_0 = arith.constant 0 : i32
    return %arg0, %c0_i32 : i32, i32
  }
}

</mosaic_0001>

<llo_original>
// kernel: tpu_custom_call.1
$region0: #{tpu_custom_call.1}
  #allocation0 [shape = 'u32[]', space=smem, size = 0x4, offset = 0x4, fixed_abs, tag = 'smem constant byte address 0x4 - core index']
  #allocation1 [shape = 'u32[72,128]{1,0:T(1,128)}', space=vmem, size = 0x9000, scoped, tag = 'internal scratch']
  %s0 = inlined_call_operand.hbm [shape: f32[8,128], index: 0, kind: input, shape index: {}]
  %s1 = inlined_call_operand.hbm [shape: f32[512,128], index: 1, kind: input, shape index: {}]
  %s2 = inlined_call_operand.hbm [shape: f32[4,128], index: 2, kind: input, shape index: {}]
  %s3 = inlined_call_operand.hbm [shape: f32[8,128], index: 3, kind: output, shape index: {}]
  %s4 = sld [smem:[#allocation0]]
  $region34: #{tpu_custom_call.1} parent=0
    _
  %s6 = ssub.s32 1, %s4
  %s7 = scalar_select 0, %s6, %s4
  $region1: #{tpu_custom_call.1} parent=0
    #allocation2 [shape = 'u8[4096]{0}', space=vmem, size = 0x1000, scoped, tag = 'input window, operand 0, single buffered']
    #allocation3 [shape = 's32[1]{0}', space=sflag, size = 0x4, scoped, tag = 'scoped memory for tpu_custom_call.1']
    #allocation4 [shape = 's32[1]{0}', space=sflag, size = 0x4, scoped, tag = 'scoped memory for tpu_custom_call.1']
    #allocation5 [shape = 'u8[262144]{0}', space=vmem, size = 0x40000, scoped, tag = 'input window, operand 1, single buffered']
    #allocation6 [shape = 's32[1]{0}', space=sflag, size = 0x4, scoped, tag = 'scoped memory for tpu_custom_call.1']
    #allocation7 [shape = 'u8[2048]{0}', space=vmem, size = 0x800, scoped, tag = 'input window, operand 2, single buffered']
    #allocation8 [shape = 'u8[4096]{0}', space=vmem, size = 0x1000, scoped, tag = 'output window, operand 0, single buffered']
    %8 = vsyncpa [#allocation3], 0
    %9 = vsyncpa [#allocation6], 0
    %10 = vsyncpa [#allocation4], 0
    // Predicated region
    $region2: #{tpu_custom_call.1} parent=1 // pred_check
      _
    $region3: #{tpu_custom_call.1} parent=1 // pred_check_branch
      %12 = sbr.rel (0) target = $region5
    $region4: #{tpu_custom_call.1} parent=1 // pred_region
      %14 = vsyncadd [#allocation3], 0
      %s16 = sshll.u32 %s0, 4
      %s17 = int_to_ptr.hbm [resolvable:$true] %s16
      %s18 = sshll.u32 [#allocation2], 4
      %s19 = int_to_ptr.vmem [resolvable:$true] %s18
      %21 = dma.hbm_to_vmem [thread:$0]  %s17, 128, %s19, [#allocation3]
    $region5: #{tpu_custom_call.1} parent=1 // pred_fallthru
      _
    // Predicated region
    $region6: #{tpu_custom_call.1} parent=1 // pred_check
      _
    $region7: #{tpu_custom_call.1} parent=1 // pred_check_branch
      %23 = sbr.rel (0) target = $region9
    $region8: #{tpu_custom_call.1} parent=1 // pred_region
      %25 = vsyncadd [#allocation6], 0
      %s26 = sshll.u32 %s1, 4
      %s27 = int_to_ptr.hbm [resolvable:$true] %s26
      %s28 = sshll.u32 [#allocation5], 4
      %s29 = int_to_ptr.vmem [resolvable:$true] %s28
      %34 = dma.hbm_to_vmem [thread:$0]  %s27, 8192, %s29, [#allocation6], 128, 128, 8
    $region9: #{tpu_custom_call.1} parent=1 // pred_fallthru
      _
    // Predicated region
    $region10: #{tpu_custom_call.1} parent=1 // pred_check
      _
    $region11: #{tpu_custom_call.1} parent=1 // pred_check_branch
      %36 = sbr.rel (0) target = $region13
    $region12: #{tpu_custom_call.1} parent=1 // pred_region
      %38 = vsyncadd [#allocation6], 0
      %s40 = sshll.u32 %s2, 4
      %s41 = int_to_ptr.hbm [resolvable:$true] %s40
      %s42 = sshll.u32 [#allocation7], 4
      %s43 = int_to_ptr.vmem [resolvable:$true] %s42
      %45 = dma.hbm_to_vmem [thread:$0]  %s41, 64, %s43, [#allocation6]
    $region13: #{tpu_custom_call.1} parent=1 // pred_fallthru
      _
    // Predicated region
    $region14: #{tpu_custom_call.1} parent=1 // pred_check
      _
    $region15: #{tpu_custom_call.1} parent=1 // pred_check_branch
      %47 = sbr.rel (0) target = $region17
    $region16: #{tpu_custom_call.1} parent=1 // pred_region
      %49 = dma.done [#allocation3], 128
    $region17: #{tpu_custom_call.1} parent=1 // pred_fallthru
      _
    // Predicated region
    $region18: #{tpu_custom_call.1} parent=1 // pred_check
      _
    $region19: #{tpu_custom_call.1} parent=1 // pred_check_branch
      %51 = sbr.rel (0) target = $region21
    $region20: #{tpu_custom_call.1} parent=1 // pred_region
      %53 = dma.done [#allocation6], 8192
    $region21: #{tpu_custom_call.1} parent=1 // pred_fallthru
      _
    // Predicated region
    $region22: #{tpu_custom_call.1} parent=1 // pred_check
      _
    $region23: #{tpu_custom_call.1} parent=1 // pred_check_branch
      %55 = sbr.rel (0) target = $region25
    $region24: #{tpu_custom_call.1} parent=1 // pred_region
      %57 = dma.done [#allocation6], 64
    $region25: #{tpu_custom_call.1} parent=1 // pred_fallthru
      _
    %v58 = vld [vmem:[#allocation2] sm:$0xff]
    %v59 = vld [vmem:[#allocation5] sm:$0xff]
    %v60 = vld [vmem:[#allocation5 + $0x8] sm:$0xff]
    %v61 = vld [vmem:[#allocation5 + $0x10] sm:$0xff]
    %v62 = vld [vmem:[#allocation5 + $0x18] sm:$0xff]
    %v63 = vld [vmem:[#allocation5 + $0x20] sm:$0xff]
    %v64 = vld [vmem:[#allocation5 + $0x28] sm:$0xff]
    %v65 = vld [vmem:[#allocation5 + $0x30] sm:$0xff]
    %v66 = vld [vmem:[#allocation5 + $0x38] sm:$0xff]
    %v67 = vld [vmem:[#allocation5 + $0x40] sm:$0xff]
    %v68 = vld [vmem:[#allocation5 + $0x48] sm:$0xff]
    %v69 = vld [vmem:[#allocation5 + $0x50] sm:$0xff]
    %v70 = vld [vmem:[#allocation5 + $0x58] sm:$0xff]
    %v71 = vld [vmem:[#allocation5 + $0x60] sm:$0xff]
    %v72 = vld [vmem:[#allocation5 + $0x68] sm:$0xff]
    %v73 = vld [vmem:[#allocation5 + $0x70] sm:$0xff]
    %v74 = vld [vmem:[#allocation5 + $0x78] sm:$0xff]
    %v75 = vld [vmem:[#allocation7] sm:$0x1]
    %v76 = vperm.slane %v75, 0
    %77 = vmatpush.msra.mxu0 %v74
    %78 = vmatpush.msra.mxu0 %v73
    %79 = vmatpush.msra.mxu0 %v72
    %80 = vmatpush.msra.mxu0 %v71
    %81 = vmatpush.msra.mxu0 %v70
    %82 = vmatpush.msra.mxu0 %v69
    %83 = vmatpush.msra.mxu0 %v68
    %84 = vmatpush.msra.mxu0 %v67
    %85 = vmatpush.msra.mxu0 %v66
    %86 = vmatpush.msra.mxu0 %v65
    %87 = vmatpush.msra.mxu0 %v64
    %88 = vmatpush.msra.mxu0 %v63
    %89 = vmatpush.msra.mxu0 %v62
    %90 = vmatpush.msra.mxu0 %v61
    %91 = vmatpush.msra.mxu0 %v60
    %92 = vmatpush.msra.mxu0 %v59
    %93 = vmatmul.f32.gmra.mxu0 %v58
    %v94 = vpop.f32.mrf.mxu0
    %v95 = vadd.f32 %v76, %v94
    %96 = vdwg.mxu0
    %v97 = vmax.f32 %v95, 0.0
    %v98 = vld [vmem:[#allocation5 + $0x80] sm:$0xff]
    %v99 = vld [vmem:[#allocation5 + $0x88] sm:$0xff]
    %v100 = vld [vmem:[#allocation5 + $0x90] sm:$0xff]
    %v101 = vld [vmem:[#allocation5 + $0x98] sm:$0xff]
    %v102 = vld [vmem:[#allocation5 + $0xa0] sm:$0xff]
    %v103 = vld [vmem:[#allocation5 + $0xa8] sm:$0xff]
    %v104 = vld [vmem:[#allocation5 + $0xb0] sm:$0xff]
    %v105 = vld [vmem:[#allocation5 + $0xb8] sm:$0xff]
    %v106 = vld [vmem:[#allocation5 + $0xc0] sm:$0xff]
    %v107 = vld [vmem:[#allocation5 + $0xc8] sm:$0xff]
    %v108 = vld [vmem:[#allocation5 + $0xd0] sm:$0xff]
    %v109 = vld [vmem:[#allocation5 + $0xd8] sm:$0xff]
    %v110 = vld [vmem:[#allocation5 + $0xe0] sm:$0xff]
    %v111 = vld [vmem:[#allocation5 + $0xe8] sm:$0xff]
    %v112 = vld [vmem:[#allocation5 + $0xf0] sm:$0xff]
    %v113 = vld [vmem:[#allocation5 + $0xf8] sm:$0xff]
    %v114 = vld [vmem:[#allocation7 + $0x1] sm:$0x1]
    %v115 = vperm.slane %v114, 0
    %116 = vmatpush.msra.mxu0 %v113
    %117 = vmatpush.msra.mxu0 %v112
    %118 = vmatpush.msra.mxu0 %v111
    %119 = vmatpush.msra.mxu0 %v110
    %120 = vmatpush.msra.mxu0 %v109
    %121 = vmatpush.msra.mxu0 %v108
    %122 = vmatpush.msra.mxu0 %v107
    %123 = vmatpush.msra.mxu0 %v106
    %124 = vmatpush.msra.mxu0 %v105
    %125 = vmatpush.msra.mxu0 %v104
    %126 = vmatpush.msra.mxu0 %v103
    %127 = vmatpush.msra.mxu0 %v102
    %128 = vmatpush.msra.mxu0 %v101
    %129 = vmatpush.msra.mxu0 %v100
    %130 = vmatpush.msra.mxu0 %v99
    %131 = vmatpush.msra.mxu0 %v98
    %132 = vmatmul.f32.gmra.mxu0 %v97
    %v133 = vpop.f32.mrf.mxu0
    %v134 = vadd.f32 %v115, %v133
    %135 = vdwg.mxu0
    %v136 = vmax.f32 %v134, 0.0
    %v137 = vld [vmem:[#allocation5 + $0x100] sm:$0xff]
    %v138 = vld [vmem:[#allocation5 + $0x108] sm:$0xff]
    %v139 = vld [vmem:[#allocation5 + $0x110] sm:$0xff]
    %v140 = vld [vmem:[#allocation5 + $0x118] sm:$0xff]
    %v141 = vld [vmem:[#allocation5 + $0x120] sm:$0xff]
    %v142 = vld [vmem:[#allocation5 + $0x128] sm:$0xff]
    %v143 = vld [vmem:[#allocation5 + $0x130] sm:$0xff]
    %v144 = vld [vmem:[#allocation5 + $0x138] sm:$0xff]
    %v145 = vld [vmem:[#allocation5 + $0x140] sm:$0xff]
    %v146 = vld [vmem:[#allocation5 + $0x148] sm:$0xff]
    %v147 = vld [vmem:[#allocation5 + $0x150] sm:$0xff]
    %v148 = vld [vmem:[#allocation5 + $0x158] sm:$0xff]
    %v149 = vld [vmem:[#allocation5 + $0x160] sm:$0xff]
    %v150 = vld [vmem:[#allocation5 + $0x168] sm:$0xff]
    %v151 = vld [vmem:[#allocation5 + $0x170] sm:$0xff]
    %v152 = vld [vmem:[#allocation5 + $0x178] sm:$0xff]
    %v153 = vld [vmem:[#allocation7 + $0x2] sm:$0x1]
    %v154 = vperm.slane %v153, 0
    %155 = vmatpush.msra.mxu0 %v152
    %156 = vmatpush.msra.mxu0 %v151
    %157 = vmatpush.msra.mxu0 %v150
    %158 = vmatpush.msra.mxu0 %v149
    %159 = vmatpush.msra.mxu0 %v148
    %160 = vmatpush.msra.mxu0 %v147
    %161 = vmatpush.msra.mxu0 %v146
    %162 = vmatpush.msra.mxu0 %v145
    %163 = vmatpush.msra.mxu0 %v144
    %164 = vmatpush.msra.mxu0 %v143
    %165 = vmatpush.msra.mxu0 %v142
    %166 = vmatpush.msra.mxu0 %v141
    %167 = vmatpush.msra.mxu0 %v140
    %168 = vmatpush.msra.mxu0 %v139
    %169 = vmatpush.msra.mxu0 %v138
    %170 = vmatpush.msra.mxu0 %v137
    %171 = vmatmul.f32.gmra.mxu0 %v136
    %v172 = vpop.f32.mrf.mxu0
    %v173 = vadd.f32 %v154, %v172
    %174 = vdwg.mxu0
    %v175 = vmax.f32 %v173, 0.0
    %v176 = vld [vmem:[#allocation5 + $0x180] sm:$0xff]
    %v177 = vld [vmem:[#allocation5 + $0x188] sm:$0xff]
    %v178 = vld [vmem:[#allocation5 + $0x190] sm:$0xff]
    %v179 = vld [vmem:[#allocation5 + $0x198] sm:$0xff]
    %v180 = vld [vmem:[#allocation5 + $0x1a0] sm:$0xff]
    %v181 = vld [vmem:[#allocation5 + $0x1a8] sm:$0xff]
    %v182 = vld [vmem:[#allocation5 + $0x1b0] sm:$0xff]
    %v183 = vld [vmem:[#allocation5 + $0x1b8] sm:$0xff]
    %v184 = vld [vmem:[#allocation5 + $0x1c0] sm:$0xff]
    %v185 = vld [vmem:[#allocation5 + $0x1c8] sm:$0xff]
    %v186 = vld [vmem:[#allocation5 + $0x1d0] sm:$0xff]
    %v187 = vld [vmem:[#allocation5 + $0x1d8] sm:$0xff]
    %v188 = vld [vmem:[#allocation5 + $0x1e0] sm:$0xff]
    %v189 = vld [vmem:[#allocation5 + $0x1e8] sm:$0xff]
    %v190 = vld [vmem:[#allocation5 + $0x1f0] sm:$0xff]
    %v191 = vld [vmem:[#allocation5 + $0x1f8] sm:$0xff]
    %v192 = vld [vmem:[#allocation7 + $0x3] sm:$0x1]
    %v193 = vperm.slane %v192, 0
    %194 = vmatpush.msra.mxu0 %v191
    %195 = vmatpush.msra.mxu0 %v190
    %196 = vmatpush.msra.mxu0 %v189
    %197 = vmatpush.msra.mxu0 %v188
    %198 = vmatpush.msra.mxu0 %v187
    %199 = vmatpush.msra.mxu0 %v186
    %200 = vmatpush.msra.mxu0 %v185
    %201 = vmatpush.msra.mxu0 %v184
    %202 = vmatpush.msra.mxu0 %v183
    %203 = vmatpush.msra.mxu0 %v182
    %204 = vmatpush.msra.mxu0 %v181
    %205 = vmatpush.msra.mxu0 %v180
    %206 = vmatpush.msra.mxu0 %v179
    %207 = vmatpush.msra.mxu0 %v178
    %208 = vmatpush.msra.mxu0 %v177
    %209 = vmatpush.msra.mxu0 %v176
    %210 = vmatmul.f32.gmra.mxu0 %v175
    %v211 = vpop.f32.mrf.mxu0
    %v212 = vadd.f32 %v193, %v211
    %213 = vdwg.mxu0
    %214 = vst [vmem:[#allocation8] sm:$0xff] %v212
    // Predicated region
    $region26: #{tpu_custom_call.1} parent=1 // pred_check
      _
    $region27: #{tpu_custom_call.1} parent=1 // pred_check_branch
      %216 = sbr.rel (0) target = $region29
    $region28: #{tpu_custom_call.1} parent=1 // pred_region
      %218 = vsyncadd [#allocation4], 0
      %s220 = sshll.u32 [#allocation8], 4
      %s221 = int_to_ptr.vmem [resolvable:$true] %s220
      %s222 = sshll.u32 %s3, 4
      %s223 = int_to_ptr.hbm [resolvable:$true] %s222
      %225 = dma.vmem_to_hbm [thread:$0]  %s221, 128, %s223, [#allocation4]
    $region29: #{tpu_custom_call.1} parent=1 // pred_fallthru
      _
    // Predicated region
    $region30: #{tpu_custom_call.1} parent=1 // pred_check
      _
    $region31: #{tpu_custom_call.1} parent=1 // pred_check_branch
      %227 = sbr.rel (0) target = $region33
    $region32: #{tpu_custom_call.1} parent=1 // pred_region
      %229 = dma.done [#allocation4], 128
    $region33: #{tpu_custom_call.1} parent=1 // pred_fallthru
      _
    %230 = vsyncpa [#allocation3], 1
    %231 = vsyncpa [#allocation6], 1
    %232 = vsyncpa [#allocation4], 1

</llo_original>
